<compile_context>
chip_gen: v6e
topology: v6e:2x2x1
jax: 0.10.0
libtpu: 0.0.40
codegen_flags: <defaults>
</compile_context>

<pallas_src>
import functools

import jax
import jax.numpy as jnp
from jax import lax
from jax.experimental import pallas as pl
from jax.experimental.pallas import tpu as pltpu


def _vmem_limit_bytes():
    """~75% of this generation's physical VMEM (None -> compiler default)."""
    try:
        return int(pltpu.get_tpu_info().vmem_capacity_bytes * 0.75)
    except Exception:  # older JAX / query unavailable -> use compiler default
        return None


# ---------------------------------------------------------------------------
# Fused kernel: one batch element per grid step, everything stays in VMEM.
# ---------------------------------------------------------------------------
def _fused_attention_kernel(x_ref, wqkv_ref, bqkv_ref, wproj_ref, bproj_ref,
                            o_ref, *, num_heads, head_dim, scale):
    H, D = num_heads, head_dim
    HD = H * D
    x = x_ref[0]                                   # (N, C)
    N, C = x.shape
    cdt = x.dtype                                  # native MXU operand dtype

    # ---- qkv projection: (N, C) @ (C, 3HD), f32 accumulation --------------
    qkv = jnp.dot(x, wqkv_ref[...], preferred_element_type=jnp.float32)
    qkv = qkv + bqkv_ref[...].astype(jnp.float32)  # (N, 3HD)
    qkv = qkv.astype(cdt)

    # torch split order along the 3HD axis is [3, H, D] with D fastest.
    out_acc = jnp.zeros((N, C), jnp.float32)
    for h in range(H):                             # static unroll (H is small)
        qh = qkv[:, h * D:(h + 1) * D]                      # (N, D)
        kh = qkv[:, HD + h * D:HD + (h + 1) * D]            # (N, D)
        vh = qkv[:, 2 * HD + h * D:2 * HD + (h + 1) * D]    # (N, D)

        # scores: contract D on both operands -> (N, N); no materialized k^T.
        s = lax.dot_general(qh, kh, (((1,), (1,)), ((), ())),
                            preferred_element_type=jnp.float32)
        s = s * scale                              # scale the f32 scores
        s = s - jnp.max(s, axis=-1, keepdims=True)
        p = jnp.exp(s)
        denom = jnp.sum(p, axis=-1, keepdims=True)
        if hasattr(pl, "reciprocal"):
            # EUP slot (otherwise idle); approximate normalization, within
            # the tolerances asserted below (documented numerics deviation).
            inv = pl.reciprocal(denom, approx=True)
        else:
            inv = 1.0 / denom
        p = (p * inv).astype(cdt)

        ctx = jnp.dot(p, vh, preferred_element_type=jnp.float32)   # (N, D)

        # Fold the output projection per head: rows [h*D:(h+1)*D] of W_proj^T.
        wp_h = wproj_ref[h * D:(h + 1) * D, :]     # (D, C)
        out_acc = out_acc + jnp.dot(ctx.astype(cdt), wp_h,
                                    preferred_element_type=jnp.float32)

    out = out_acc + bproj_ref[...].astype(jnp.float32)
    # Single HBM write per grid step (module's true output width).
    o_ref[0] = out.astype(o_ref.dtype)


# ---------------------------------------------------------------------------
# Full module forward.
# ---------------------------------------------------------------------------
def attention_pallas(x, wqkv, bqkv, wproj, bproj, *, num_heads, head_dim,
                     qk_scale=None):
    """x: (B, N, C). wqkv: (3*H*D, C) torch layout. wproj: (C, H*D) torch layout."""
    B, N, C = x.shape
    H, D = num_heads, head_dim
    HD = H * D
    scale = float(qk_scale) if qk_scale is not None else float(D) ** (-0.5)

    # Weight-only transposes (constant under jit); no activation relayouts
    # remain outside the kernel.
    wqkv_t = wqkv.T                    # (C, 3HD)
    wproj_t = wproj.T                  # (HD, C)
    bqkv2d = bqkv.reshape(1, 3 * HD)
    bproj2d = bproj.reshape(1, C)

    kernel = functools.partial(_fused_attention_kernel,
                               num_heads=H, head_dim=D, scale=scale)

    # TODO(synk): for long sequences add a q-tile grid axis + flash-style
    # online-softmax K tiling so the (N, N) score tile stays bounded in VMEM
    # (needed ~2x earlier on v7x's 64 MiB than on v5e/v6e's 128 MiB).
    return pl.pallas_call(
        kernel,
        out_shape=jax.ShapeDtypeStruct((B, N, C), x.dtype),
        grid_spec=pltpu.PrefetchScalarGridSpec(
            num_scalar_prefetch=0,
            grid=(B,),
            in_specs=[
                pl.BlockSpec((1, N, C), lambda b: (b, 0, 0)),   # x tile
                pl.BlockSpec((C, 3 * HD), lambda b: (0, 0)),    # W_qkv^T (resident)
                pl.BlockSpec((1, 3 * HD), lambda b: (0, 0)),    # b_qkv   (resident)
                pl.BlockSpec((HD, C), lambda b: (0, 0)),        # W_proj^T (resident)
                pl.BlockSpec((1, C), lambda b: (0, 0)),         # b_proj  (resident)
            ],
            out_specs=pl.BlockSpec((1, N, C), lambda b: (b, 0, 0)),
        ),
        compiler_params=pltpu.CompilerParams(
            dimension_semantics=("parallel",),
            vmem_limit_bytes=_vmem_limit_bytes()),
    )(x, wqkv_t, bqkv2d, wproj_t, bproj2d)


def attention_ref(x, wqkv, bqkv, wproj, bproj, *, num_heads, head_dim,
                  qk_scale=None):
    """Pure-JAX reference mirroring the PyTorch forward exactly."""
    B, N, C = x.shape
    H, D = num_heads, head_dim
    scale = qk_scale or D ** (-0.5)

    qkv = x @ wqkv.T + bqkv                               # (B, N, 3*H*D)
    qkv = qkv.reshape(B, N, 3, H, D).transpose((2, 0, 3, 1, 4))
    q, k, v = qkv[0], qkv[1], qkv[2]                      # (B, H, N, D)
    attn = (q @ jnp.swapaxes(k, -2, -1)) * scale          # (B, H, N, N)
    attn = jax.nn.softmax(attn, axis=-1)
    out = (attn @ v).transpose((0, 2, 1, 3)).reshape(B, N, H * D)
    return out @ wproj.T + bproj                          # (B, N, C)


if __name__ == "__main__":
    # Small config consistent with the module: dim=C=32, num_heads=2, head_dim=64.
    B, N, C = 2, 8, 32
    H, D = 2, 64
    HD = H * D

    key = jax.random.PRNGKey(0)
    kx, kw1, kb1, kw2, kb2 = jax.random.split(key, 5)

    x = jax.random.normal(kx, (B, N, C), dtype=jnp.float32)
    wqkv = 0.02 * jax.random.normal(kw1, (3 * HD, C), dtype=jnp.float32)
    bqkv = 0.02 * jax.random.normal(kb1, (3 * HD,), dtype=jnp.float32)
    wproj = 0.02 * jax.random.normal(kw2, (C, HD), dtype=jnp.float32)
    bproj = 0.02 * jax.random.normal(kb2, (C,), dtype=jnp.float32)

    fn = jax.jit(functools.partial(attention_pallas, num_heads=H, head_dim=D))

    # float32 path ---------------------------------------------------------
    out = jax.block_until_ready(fn(x, wqkv, bqkv, wproj, bproj))
    ref = attention_ref(x, wqkv, bqkv, wproj, bproj, num_heads=H, head_dim=D)
    assert out.shape == (B, N, C)
    assert jnp.allclose(out, ref, atol=2e-3, rtol=2e-3), "f32 mismatch vs reference"

    # bf16 operand path (MXU-native dtype, no in-kernel up-casts) -----------
    xb, wqb, bqb, wpb, bpb = (a.astype(jnp.bfloat16)
                              for a in (x, wqkv, bqkv, wproj, bproj))
    out_bf16 = jax.block_until_ready(fn(xb, wqb, bqb, wpb, bpb))
    ref_bf16 = attention_ref(xb.astype(jnp.float32), wqb.astype(jnp.float32),
                             bqb.astype(jnp.float32), wpb.astype(jnp.float32),
                             bpb.astype(jnp.float32), num_heads=H, head_dim=D)
    assert jnp.allclose(out_bf16.astype(jnp.float32), ref_bf16,
                        atol=5e-2, rtol=5e-2), "bf16 mismatch vs reference"

    print("KERNEL_OK")
</pallas_src>

<mosaic_0001>
module attributes {stable_mosaic.version = 11 : i64} {
  func.func @_fused_attention_kernel(%arg0: i32, %arg1: memref<1x8x32xf32, #tpu.memory_space<vmem>>, %arg2: memref<32x384xf32, #tpu.memory_space<vmem>>, %arg3: memref<1x384xf32, #tpu.memory_space<vmem>>, %arg4: memref<128x32xf32, #tpu.memory_space<vmem>>, %arg5: memref<1x32xf32, #tpu.memory_space<vmem>>, %arg6: memref<1x8x32xf32, #tpu.memory_space<vmem>>) attributes {dimension_semantics = [#tpu.dimension_semantics<parallel>], iteration_bounds = array<i64: 2>, scalar_prefetch = 0 : i64, scratch_operands = 0 : i64, tpu.core_type = #tpu.core_type<tc>, window_params = [{transform_indices = @transform_0, window_bounds = array<i64: 1, 8, 32>}, {pipeline_mode = #tpu.pipeline_mode<synchronous>, transform_indices = @transform_1, window_bounds = array<i64: 32, 384>}, {pipeline_mode = #tpu.pipeline_mode<synchronous>, transform_indices = @transform_2, window_bounds = array<i64: 1, 384>}, {pipeline_mode = #tpu.pipeline_mode<synchronous>, transform_indices = @transform_3, window_bounds = array<i64: 128, 32>}, {pipeline_mode = #tpu.pipeline_mode<synchronous>, transform_indices = @transform_4, window_bounds = array<i64: 1, 32>}, {transform_indices = @transform_5, window_bounds = array<i64: 1, 8, 32>}]} {
    %c0 = arith.constant 0 : index
    %c0_0 = arith.constant 0 : index
    %c0_1 = arith.constant 0 : index
    %0 = vector.load %arg1[%c0, %c0_0, %c0_1] : memref<1x8x32xf32, #tpu.memory_space<vmem>>, vector<1x8x32xf32>
    %1 = vector.shape_cast %0 : vector<1x8x32xf32> to vector<8x32xf32>
    %c0_2 = arith.constant 0 : index
    %c0_3 = arith.constant 0 : index
    %2 = vector.load %arg2[%c0_2, %c0_3] : memref<32x384xf32, #tpu.memory_space<vmem>>, vector<32x384xf32>
    %cst = arith.constant dense<0.000000e+00> : vector<8x384xf32>
    %3 = tpu.matmul %1, %2, %cst {dimension_numbers = #tpu.dot_dimension_numbers<[1], [0], [0], [1], [0, 0, 1, 1], [], []>} : vector<8x32xf32>, vector<32x384xf32>, vector<8x384xf32> -> vector<8x384xf32>
    %c0_4 = arith.constant 0 : index
    %c0_5 = arith.constant 0 : index
    %4 = vector.load %arg3[%c0_4, %c0_5] : memref<1x384xf32, #tpu.memory_space<vmem>>, vector<1x384xf32>
    %5 = vector.broadcast %4 : vector<1x384xf32> to vector<8x384xf32>
    %6 = arith.addf %3, %5 : vector<8x384xf32>
    %cst_6 = arith.constant 0.000000e+00 : f32
    %7 = vector.broadcast %cst_6 : f32 to vector<8x32xf32>
    %8 = vector.extract_strided_slice %6 {offsets = [0, 0], sizes = [8, 64], strides = [1, 1]} : vector<8x384xf32> to vector<8x64xf32>
    %9 = vector.extract_strided_slice %6 {offsets = [0, 128], sizes = [8, 64], strides = [1, 1]} : vector<8x384xf32> to vector<8x64xf32>
    %10 = vector.extract_strided_slice %6 {offsets = [0, 256], sizes = [8, 64], strides = [1, 1]} : vector<8x384xf32> to vector<8x64xf32>
    %cst_7 = arith.constant dense<0.000000e+00> : vector<8x8xf32>
    %11 = tpu.matmul %8, %9, %cst_7 {dimension_numbers = #tpu.dot_dimension_numbers<[1], [1], [0], [0], [0, 0, 1, 0], [], []>} : vector<8x64xf32>, vector<8x64xf32>, vector<8x8xf32> -> vector<8x8xf32>
    %cst_8 = arith.constant 1.250000e-01 : f32
    %12 = vector.broadcast %cst_8 : f32 to vector<8x8xf32>
    %13 = arith.mulf %11, %12 : vector<8x8xf32>
    %cst_9 = arith.constant dense<0xFF800000> : vector<8xf32>
    %14 = vector.multi_reduction <maximumf>, %13, %cst_9 [1] : vector<8x8xf32> to vector<8xf32>
    %15 = vector.shape_cast %14 : vector<8xf32> to vector<8x1xf32>
    %16 = vector.broadcast %15 : vector<8x1xf32> to vector<8x8xf32>
    %17 = arith.subf %13, %16 : vector<8x8xf32>
    %18 = math.exp %17 : vector<8x8xf32>
    %cst_10 = arith.constant dense<0.000000e+00> : vector<8xf32>
    %19 = vector.multi_reduction <add>, %18, %cst_10 [1] : vector<8x8xf32> to vector<8xf32>
    %20 = vector.shape_cast %19 : vector<8xf32> to vector<8x1xf32>
    %21 = tpu.reciprocal %20 {approx = true} : vector<8x1xf32> -> vector<8x1xf32>
    %22 = vector.broadcast %21 : vector<8x1xf32> to vector<8x8xf32>
    %23 = arith.mulf %18, %22 : vector<8x8xf32>
    %cst_11 = arith.constant dense<0.000000e+00> : vector<8x64xf32>
    %24 = tpu.matmul %23, %10, %cst_11 {dimension_numbers = #tpu.dot_dimension_numbers<[1], [0], [0], [1], [0, 0, 1, 1], [], []>} : vector<8x8xf32>, vector<8x64xf32>, vector<8x64xf32> -> vector<8x64xf32>
    %c0_12 = arith.constant 0 : index
    %c0_13 = arith.constant 0 : index
    %25 = vector.load %arg4[%c0_12, %c0_13] : memref<128x32xf32, #tpu.memory_space<vmem>>, vector<64x32xf32>
    %cst_14 = arith.constant dense<0.000000e+00> : vector<8x32xf32>
    %26 = tpu.matmul %24, %25, %cst_14 {dimension_numbers = #tpu.dot_dimension_numbers<[1], [0], [0], [1], [0, 0, 1, 1], [], []>} : vector<8x64xf32>, vector<64x32xf32>, vector<8x32xf32> -> vector<8x32xf32>
    %27 = arith.addf %7, %26 : vector<8x32xf32>
    %28 = vector.extract_strided_slice %6 {offsets = [0, 64], sizes = [8, 64], strides = [1, 1]} : vector<8x384xf32> to vector<8x64xf32>
    %29 = vector.extract_strided_slice %6 {offsets = [0, 192], sizes = [8, 64], strides = [1, 1]} : vector<8x384xf32> to vector<8x64xf32>
    %30 = vector.extract_strided_slice %6 {offsets = [0, 320], sizes = [8, 64], strides = [1, 1]} : vector<8x384xf32> to vector<8x64xf32>
    %cst_15 = arith.constant dense<0.000000e+00> : vector<8x8xf32>
    %31 = tpu.matmul %28, %29, %cst_15 {dimension_numbers = #tpu.dot_dimension_numbers<[1], [1], [0], [0], [0, 0, 1, 0], [], []>} : vector<8x64xf32>, vector<8x64xf32>, vector<8x8xf32> -> vector<8x8xf32>
    %cst_16 = arith.constant 1.250000e-01 : f32
    %32 = vector.broadcast %cst_16 : f32 to vector<8x8xf32>
    %33 = arith.mulf %31, %32 : vector<8x8xf32>
    %cst_17 = arith.constant dense<0xFF800000> : vector<8xf32>
    %34 = vector.multi_reduction <maximumf>, %33, %cst_17 [1] : vector<8x8xf32> to vector<8xf32>
    %35 = vector.shape_cast %34 : vector<8xf32> to vector<8x1xf32>
    %36 = vector.broadcast %35 : vector<8x1xf32> to vector<8x8xf32>
    %37 = arith.subf %33, %36 : vector<8x8xf32>
    %38 = math.exp %37 : vector<8x8xf32>
    %cst_18 = arith.constant dense<0.000000e+00> : vector<8xf32>
    %39 = vector.multi_reduction <add>, %38, %cst_18 [1] : vector<8x8xf32> to vector<8xf32>
    %40 = vector.shape_cast %39 : vector<8xf32> to vector<8x1xf32>
    %41 = tpu.reciprocal %40 {approx = true} : vector<8x1xf32> -> vector<8x1xf32>
    %42 = vector.broadcast %41 : vector<8x1xf32> to vector<8x8xf32>
    %43 = arith.mulf %38, %42 : vector<8x8xf32>
    %cst_19 = arith.constant dense<0.000000e+00> : vector<8x64xf32>
    %44 = tpu.matmul %43, %30, %cst_19 {dimension_numbers = #tpu.dot_dimension_numbers<[1], [0], [0], [1], [0, 0, 1, 1], [], []>} : vector<8x8xf32>, vector<8x64xf32>, vector<8x64xf32> -> vector<8x64xf32>
    %c64 = arith.constant 64 : index
    %c0_20 = arith.constant 0 : index
    %45 = vector.load %arg4[%c64, %c0_20] : memref<128x32xf32, #tpu.memory_space<vmem>>, vector<64x32xf32>
    %cst_21 = arith.constant dense<0.000000e+00> : vector<8x32xf32>
    %46 = tpu.matmul %44, %45, %cst_21 {dimension_numbers = #tpu.dot_dimension_numbers<[1], [0], [0], [1], [0, 0, 1, 1], [], []>} : vector<8x64xf32>, vector<64x32xf32>, vector<8x32xf32> -> vector<8x32xf32>
    %47 = arith.addf %27, %46 : vector<8x32xf32>
    %c0_22 = arith.constant 0 : index
    %c0_23 = arith.constant 0 : index
    %48 = vector.load %arg5[%c0_22, %c0_23] : memref<1x32xf32, #tpu.memory_space<vmem>>, vector<1x32xf32>
    %49 = vector.broadcast %48 : vector<1x32xf32> to vector<8x32xf32>
    %50 = arith.addf %47, %49 : vector<8x32xf32>
    %c0_24 = arith.constant 0 : index
    %c0_25 = arith.constant 0 : index
    %c0_26 = arith.constant 0 : index
    %51 = vector.load %arg6[%c0_24, %c0_25, %c0_26] : memref<1x8x32xf32, #tpu.memory_space<vmem>>, vector<1x8x32xf32>
    %52 = vector.shape_cast %51 : vector<1x8x32xf32> to vector<8x32xf32>
    %53 = vector.shape_cast %50 : vector<8x32xf32> to vector<1x8x32xf32>
    tpu.vector_store %arg6[%c0_24, %c0_25, %c0_26], %53 {strides = array<i32>} : memref<1x8x32xf32, #tpu.memory_space<vmem>>, vector<1x8x32xf32>,
    return
  }
  func.func @transform_0(%arg0: i32) -> (i32, i32, i32) {
    %c0_i32 = arith.constant 0 : i32
    %c0_i32_0 = arith.constant 0 : i32
    %c0_i32_1 = arith.constant 0 : i32
    return %arg0, %c0_i32, %c0_i32_0 : i32, i32, i32
  }
  func.func @transform_1(%arg0: i32) -> (i32, i32) {
    %c0_i32 = arith.constant 0 : i32
    %c0_i32_0 = arith.constant 0 : i32
    %c0_i32_1 = arith.constant 0 : i32
    return %c0_i32, %c0_i32_0 : i32, i32
  }
  func.func @transform_2(%arg0: i32) -> (i32, i32) {
    %c0_i32 = arith.constant 0 : i32
    %c0_i32_0 = arith.constant 0 : i32
    %c0_i32_1 = arith.constant 0 : i32
    return %c0_i32, %c0_i32_0 : i32, i32
  }
  func.func @transform_3(%arg0: i32) -> (i32, i32) {
    %c0_i32 = arith.constant 0 : i32
    %c0_i32_0 = arith.constant 0 : i32
    %c0_i32_1 = arith.constant 0 : i32
    return %c0_i32, %c0_i32_0 : i32, i32
  }
  func.func @transform_4(%arg0: i32) -> (i32, i32) {
    %c0_i32 = arith.constant 0 : i32
    %c0_i32_0 = arith.constant 0 : i32
    %c0_i32_1 = arith.constant 0 : i32
    return %c0_i32, %c0_i32_0 : i32, i32
  }
  func.func @transform_5(%arg0: i32) -> (i32, i32, i32) {
    %c0_i32 = arith.constant 0 : i32
    %c0_i32_0 = arith.constant 0 : i32
    %c0_i32_1 = arith.constant 0 : i32
    return %arg0, %c0_i32, %c0_i32_0 : i32, i32, i32
  }
}

</mosaic_0001>

<llo_original>
// kernel: attention_pallas.1
$region0: #{attention_pallas.1}
  #allocation0 [shape = 'u32[]', space=smem, size = 0x4, offset = 0x4, fixed_abs, tag = 'smem constant byte address 0x4 - core index']
  #allocation1 [shape = 'u32[144,128]{1,0:T(1,128)}', space=vmem, size = 0x12000, scoped, tag = 'internal scratch']
  %s0 = inlined_call_operand.vmem [shape: f32[2,8,32], index: 0, kind: input, shape index: {}]
  %s1 = inlined_call_operand.vmem [shape: f32[32,384], index: 1, kind: input, shape index: {}]
  %s2 = inlined_call_operand.vmem [shape: f32[1,384], index: 2, kind: input, shape index: {}]
  %s3 = inlined_call_operand.vmem [shape: f32[128,32], index: 3, kind: input, shape index: {}]
  %s4 = inlined_call_operand.vmem [shape: f32[1,32], index: 4, kind: input, shape index: {}]
  %s5 = inlined_call_operand.hbm [shape: f32[2,8,32], index: 5, kind: output, shape index: {}]
  %s6 = sld [smem:[#allocation0]]
  $region53: #{attention_pallas.1} parent=0
    _
  %s8 = ssub.s32 1, %s6
  %s9 = scalar_select 0, %s8, %s6
  $region1: #{attention_pallas.1} parent=0
    #allocation2 [shape = 'u8[8192]{0}', space=vmem, size = 0x2000, scoped, tag = 'output window, operand 0']
    #allocation3 [shape = 's32[2]{0}', space=sflag, size = 0x8, scoped, tag = 'scoped memory for attention_pallas.1']
    %10 = vsyncpa [#allocation3], 0
    %s11 = scalar_lea.sflag [#allocation3], 1
    %12 = vsyncpa %s11, 0
    loop: start=0, step=1, limit=4
    $region2: #{attention_pallas.1} parent=1 // loop_pre_header
      _
    $region3: #{attention_pallas.1} parent=1 // loop_header
      %s14 = sphi 0, %s18
      %p15 = scmp.ge.s32.totalorder %s14, 4
      %s24 = sphi 0, %s26
      %s27 = sphi 0, %s24
      %s28 = sphi 0, %s27
      %s44 = sphi 0, %s28
      %s48 = sphi 0, %s48
      %s50 = sphi 0, %s48
      %s51 = sphi 0, %s50
      %s65 = sphi 0, %s51
      %s69 = sphi 0, %s69
      %s71 = sphi 0, %s69
      %s72 = sphi 0, %s71
      %s86 = sphi 0, %s72
      %s90 = sphi 0, %s90
      %s92 = sphi 0, %s90
      %s93 = sphi 0, %s92
      %s107 = sphi 0, %s93
      %s111 = sphi 0, %s111
      %s113 = sphi 0, %s111
      %s114 = sphi 0, %s113
      %s128 = sphi 0, %s114
      %s134 = sphi 0, %s136
      %s137 = sphi 0, %s134
      %s138 = sphi 0, %s137
      %s154 = sphi 0, %s138
    $region4: #{attention_pallas.1} parent=1 // loop_header_branch
      %17 = sbr.rel (%p15) target = $region8
    $region5: #{attention_pallas.1} parent=1 // loop_body
      %s19 = ssub.s32 %s14, 1
      %s20 = ssub.s32 %s14, 2
      %s21 = sadd.s32 %s14, 1
      %s22 = ssub.s32 %s14, %s21
      %p23 = scmp.eq.s32.totalorder %s22, 0
      %s25 = sadd.s32 %s24, 1
      %s26 = scalar_select %p23, %s24, %s25
      %p29 = pneg %p23
      %p30 = scmp.eq.s32.totalorder %s14, 1
      %p31 = por %p29, %p30
      %p32 = scmp.ne.s32.totalorder %s24, %s27
      %p33 = scmp.eq.s32.totalorder %s14, 0
      %p34 = por %p32, %p33
      %p35 = scmp.ne.s32.totalorder %s24, %s27
      %p36 = scmp.eq.s32.totalorder %s19, 1
      %p37 = por %p35, %p36
      %p38 = scmp.ne.s32.totalorder %s27, %s28
      %p39 = scmp.eq.s32.totalorder %s19, 0
      %p40 = por %p38, %p39
      %p41 = scmp.ne.s32.totalorder %s27, %s28
      %p42 = scmp.eq.s32.totalorder %s20, 1
      %p43 = por %p41, %p42
      %p45 = scmp.ne.s32.totalorder %s28, %s44
      %p46 = scmp.eq.s32.totalorder %s20, 0
      %p47 = por %p45, %p46
      %s49 = sadd.s32 %s48, 1
      %p52 = scmp.eq.s32.totalorder %s14, 1
      %p53 = scmp.ne.s32.totalorder %s48, %s50
      %p54 = scmp.eq.s32.totalorder %s14, 0
      %p55 = por %p53, %p54
      %p56 = scmp.ne.s32.totalorder %s48, %s50
      %p57 = scmp.eq.s32.totalorder %s19, 1
      %p58 = por %p56, %p57
      %p59 = scmp.ne.s32.totalorder %s50, %s51
      %p60 = scmp.eq.s32.totalorder %s19, 0
      %p61 = por %p59, %p60
      %p62 = scmp.ne.s32.totalorder %s50, %s51
      %p63 = scmp.eq.s32.totalorder %s20, 1
      %p64 = por %p62, %p63
      %p66 = scmp.ne.s32.totalorder %s51, %s65
      %p67 = scmp.eq.s32.totalorder %s20, 0
      %p68 = por %p66, %p67
      %s70 = sadd.s32 %s69, 1
      %p73 = scmp.eq.s32.totalorder %s14, 1
      %p74 = scmp.ne.s32.totalorder %s69, %s71
      %p75 = scmp.eq.s32.totalorder %s14, 0
      %p76 = por %p74, %p75
      %p77 = scmp.ne.s32.totalorder %s69, %s71
      %p78 = scmp.eq.s32.totalorder %s19, 1
      %p79 = por %p77, %p78
      %p80 = scmp.ne.s32.totalorder %s71, %s72
      %p81 = scmp.eq.s32.totalorder %s19, 0
      %p82 = por %p80, %p81
      %p83 = scmp.ne.s32.totalorder %s71, %s72
      %p84 = scmp.eq.s32.totalorder %s20, 1
      %p85 = por %p83, %p84
      %p87 = scmp.ne.s32.totalorder %s72, %s86
      %p88 = scmp.eq.s32.totalorder %s20, 0
      %p89 = por %p87, %p88
      %s91 = sadd.s32 %s90, 1
      %p94 = scmp.eq.s32.totalorder %s14, 1
      %p95 = scmp.ne.s32.totalorder %s90, %s92
      %p96 = scmp.eq.s32.totalorder %s14, 0
      %p97 = por %p95, %p96
      %p98 = scmp.ne.s32.totalorder %s90, %s92
      %p99 = scmp.eq.s32.totalorder %s19, 1
      %p100 = por %p98, %p99
      %p101 = scmp.ne.s32.totalorder %s92, %s93
      %p102 = scmp.eq.s32.totalorder %s19, 0
      %p103 = por %p101, %p102
      %p104 = scmp.ne.s32.totalorder %s92, %s93
      %p105 = scmp.eq.s32.totalorder %s20, 1
      %p106 = por %p104, %p105
      %p108 = scmp.ne.s32.totalorder %s93, %s107
      %p109 = scmp.eq.s32.totalorder %s20, 0
      %p110 = por %p108, %p109
      %s112 = sadd.s32 %s111, 1
      %p115 = scmp.eq.s32.totalorder %s14, 1
      %p116 = scmp.ne.s32.totalorder %s111, %s113
      %p117 = scmp.eq.s32.totalorder %s14, 0
      %p118 = por %p116, %p117
      %p119 = scmp.ne.s32.totalorder %s111, %s113
      %p120 = scmp.eq.s32.totalorder %s19, 1
      %p121 = por %p119, %p120
      %p122 = scmp.ne.s32.totalorder %s113, %s114
      %p123 = scmp.eq.s32.totalorder %s19, 0
      %p124 = por %p122, %p123
      %p125 = scmp.ne.s32.totalorder %s113, %s114
      %p126 = scmp.eq.s32.totalorder %s20, 1
      %p127 = por %p125, %p126
      %p129 = scmp.ne.s32.totalorder %s114, %s128
      %p130 = scmp.eq.s32.totalorder %s20, 0
      %p131 = por %p129, %p130
      %s132 = ssub.s32 %s14, %s21
      %p133 = scmp.eq.s32.totalorder %s132, 0
      %s135 = sadd.s32 %s134, 1
      %s136 = scalar_select %p133, %s134, %s135
      %p139 = pneg %p133
      %p140 = scmp.eq.s32.totalorder %s14, 1
      %p141 = por %p139, %p140
      %p142 = scmp.ne.s32.totalorder %s134, %s137
      %p143 = scmp.eq.s32.totalorder %s14, 0
      %p144 = por %p142, %p143
      %p145 = scmp.ne.s32.totalorder %s134, %s137
      %p146 = scmp.eq.s32.totalorder %s19, 1
      %p147 = por %p145, %p146
      %p148 = scmp.ne.s32.totalorder %s137, %s138
      %p149 = scmp.eq.s32.totalorder %s19, 0
      %p150 = por %p148, %p149
      %p151 = scmp.ne.s32.totalorder %s137, %s138
      %p152 = scmp.eq.s32.totalorder %s20, 1
      %p153 = por %p151, %p152
      %p155 = scmp.ne.s32.totalorder %s138, %s154
      %p156 = scmp.eq.s32.totalorder %s20, 0
      %p157 = por %p155, %p156
      %p158 = scmp.le.s32.totalorder 1, %s14
      %p159 = scmp.lt.s32.totalorder %s14, 3
      %p160 = pnand %p158, %p159
      %p161 = pneg %p160
      // Predicated region
      $region9: #{attention_pallas.1} parent=5 // pred_check
        _
      $region10: #{attention_pallas.1} parent=5 // pred_check_branch
        %163 = sbr.rel (%p160) target = $region12
      $region11: #{attention_pallas.1} parent=5 // pred_region
        %s164 = ssub.s32 %s14, 1
        // Predicated region
        $region13: #{attention_pallas.1} parent=11 // pred_check
          %p165 = pneg %p61
        $region14: #{attention_pallas.1} parent=11 // pred_check_branch
          %167 = sbr.rel (%p165) target = $region16
        $region15: #{attention_pallas.1} parent=11 // pred_region
          _
        $region16: #{attention_pallas.1} parent=11 // pred_fallthru
          _
        // Predicated region
        $region17: #{attention_pallas.1} parent=11 // pred_check
          %p168 = pneg %p82
        $region18: #{attention_pallas.1} parent=11 // pred_check_branch
          %170 = sbr.rel (%p168) target = $region20
        $region19: #{attention_pallas.1} parent=11 // pred_region
          _
        $region20: #{attention_pallas.1} parent=11 // pred_fallthru
          _
        // Predicated region
        $region21: #{attention_pallas.1} parent=11 // pred_check
          %p171 = pneg %p103
        $region22: #{attention_pallas.1} parent=11 // pred_check_branch
          %173 = sbr.rel (%p171) target = $region24
        $region23: #{attention_pallas.1} parent=11 // pred_region
          _
        $region24: #{attention_pallas.1} parent=11 // pred_fallthru
          _
        // Predicated region
        $region25: #{attention_pallas.1} parent=11 // pred_check
          %p174 = pneg %p124
        $region26: #{attention_pallas.1} parent=11 // pred_check_branch
          %176 = sbr.rel (%p174) target = $region28
        $region27: #{attention_pallas.1} parent=11 // pred_region
          _
        $region28: #{attention_pallas.1} parent=11 // pred_fallthru
          _
      $region12: #{attention_pallas.1} parent=5 // pred_fallthru
        _
      %p177 = scmp.lt.s32.totalorder %s14, 2
      // Predicated region
      $region29: #{attention_pallas.1} parent=5 // pred_check
        %p178 = pneg %p177
      $region30: #{attention_pallas.1} parent=5 // pred_check_branch
        %180 = sbr.rel (%p178) target = $region32
      $region31: #{attention_pallas.1} parent=5 // pred_region
        // Predicated region
        $region33: #{attention_pallas.1} parent=31 // pred_check
          %p181 = pneg %p34
        $region34: #{attention_pallas.1} parent=31 // pred_check_branch
          %183 = sbr.rel (%p181) target = $region36
        $region35: #{attention_pallas.1} parent=31 // pred_region
          %p184 = scmp.lt.s32.totalorder %s14, 1
          %s185 = scalar_select %p184, %s14, 1
          %s186 = smul.addr %s185, 8
          %s187 = scalar_lea.vmem %s0, %s186
        $region36: #{attention_pallas.1} parent=31 // pred_fallthru
          _
      $region32: #{attention_pallas.1} parent=5 // pred_fallthru
        _
      %p188 = scmp.le.s32.totalorder 1, %s14
      %p189 = scmp.lt.s32.totalorder %s14, 3
      %p190 = pnand %p188, %p189
      %p191 = pneg %p190
      // Predicated region
      $region37: #{attention_pallas.1} parent=5 // pred_check
        _
      $region38: #{attention_pallas.1} parent=5 // pred_check_branch
        %193 = sbr.rel (%p190) target = $region40
      $region39: #{attention_pallas.1} parent=5 // pred_region
        %s194 = ssub.s32 %s14, 1
        %p195 = scmp.lt.s32.totalorder %s19, 1
        %s196 = scalar_select %p195, %s19, 1
        %s197 = smul.addr %s196, 8
        %s198 = scalar_lea.vmem %s0, %s197
        %p199 = pneg %p40
        %p200 = pneg %p37
        %p201 = pneg %p61
        %p202 = pneg %p58
        %p203 = pneg %p82
        %p204 = pneg %p79
        %p205 = pneg %p103
        %p206 = pneg %p100
        %p207 = pneg %p124
        %p208 = pneg %p121
        %p209 = pneg %p150
        %p210 = pneg %p147
        %s211 = sand.u32 %s137, 1
        %s212 = scalar_lea.sflag [#allocation3], %s211
        %s213 = sand.u32 %s137, 1
        %s214 = smul.addr %s213, 8
        %s215 = scalar_lea.vmem [#allocation2], %s214
        %p216 = scmp.lt.s32.totalorder %s19, 1
        %s217 = scalar_select %p216, %s19, 1
        %s218 = smul.addr %s217, 8
        %s219 = scalar_lea.vmem %s0, %s218
        %v220 = vld [vmem:[%s219] sm:$0xff]
        %v221 = vld [vmem:[%s1] sm:$0xff]
        %v222 = vld [vmem:[%s1 + $0x8] sm:$0xff]
        %v223 = vld [vmem:[%s1 + $0x10] sm:$0xff]
        %v224 = vld [vmem:[%s1 + $0x18] sm:$0xff]
        %v225 = vld [vmem:[%s1 + $0x20] sm:$0xff]
        %v226 = vld [vmem:[%s1 + $0x28] sm:$0xff]
        %v227 = vld [vmem:[%s1 + $0x30] sm:$0xff]
        %v228 = vld [vmem:[%s1 + $0x38] sm:$0xff]
        %v229 = vld [vmem:[%s1 + $0x40] sm:$0xff]
        %v230 = vld [vmem:[%s1 + $0x48] sm:$0xff]
        %v231 = vld [vmem:[%s1 + $0x50] sm:$0xff]
        %v232 = vld [vmem:[%s1 + $0x58] sm:$0xff]
        %v233 = vld [vmem:[%s2] sm:$0x7]
        %v235 = vlaneseq
        %v236 = vshrl.u32 %v235, 7
        %v237 = vsub.s32 0, %v236
        %v238 = vrot.slane %v233, %v237
        %v239 = vlaneseq
        %v240 = vshrl.u32 %v239, 7
        %v241 = vsub.s32 1, %v240
        %v242 = vrot.slane %v233, %v241
        %v243 = vlaneseq
        %v244 = vshrl.u32 %v243, 7
        %v245 = vsub.s32 2, %v244
        %v246 = vrot.slane %v233, %v245
        %vm250 = vcmask 261120
        %v252 = vsel %vm250, %v220, 0
        %254 = vmatprep.subr.mxu0 0.0
        %255 = vmatpush1.msra.mxu0 0.0
        %256 = vmatprep.subr.mxu0 0.0
        %257 = vmatpush1.msra.mxu0 0.0
        %258 = vmatprep.subr.mxu0 0.0
        %259 = vmatpush1.msra.mxu0 0.0
        %260 = vmatprep.subr.mxu0 0.0
        %261 = vmatpush1.msra.mxu0 0.0
        %262 = vmatprep.subr.mxu0 0.0
        %263 = vmatpush1.msra.mxu0 0.0
        %264 = vmatprep.subr.mxu0 0.0
        %265 = vmatpush1.msra.mxu0 0.0
        %266 = vmatprep.subr.mxu0 0.0
        %267 = vmatpush1.msra.mxu0 0.0
        %268 = vmatprep.subr.mxu0 0.0
        %269 = vmatpush1.msra.mxu0 0.0
        %270 = vmatprep.subr.mxu0 0.0
        %271 = vmatpush1.msra.mxu0 0.0
        %272 = vmatprep.subr.mxu0 0.0
        %273 = vmatpush1.msra.mxu0 0.0
        %274 = vmatprep.subr.mxu0 0.0
        %275 = vmatpush1.msra.mxu0 0.0
        %276 = vmatprep.subr.mxu0 0.0
        %277 = vmatpush1.msra.mxu0 0.0
        %278 = vmatprep.subr.mxu0 %v231
        %279 = vmatpush1.msra.mxu0 %v230
        %280 = vmatprep.subr.mxu0 %v228
        %281 = vmatpush1.msra.mxu0 %v227
        %282 = vmatprep.subr.mxu0 %v225
        %283 = vmatpush1.msra.mxu0 %v224
        %284 = vmatprep.subr.mxu0 %v222
        %285 = vmatpush1.msra.mxu0 %v221
        %286 = vmatprep.subr.mxu0 0.0
        %287 = vmatpush2.msra.mxu0 0.0
        %288 = vmatprep.subr.mxu0 0.0
        %289 = vmatpush2.msra.mxu0 0.0
        %290 = vmatprep.subr.mxu0 0.0
        %291 = vmatpush2.msra.mxu0 0.0
        %292 = vmatprep.subr.mxu0 0.0
        %293 = vmatpush2.msra.mxu0 0.0
        %294 = vmatprep.subr.mxu0 0.0
        %295 = vmatpush2.msra.mxu0 0.0
        %296 = vmatprep.subr.mxu0 0.0
        %297 = vmatpush2.msra.mxu0 0.0
        %298 = vmatprep.subr.mxu0 0.0
        %299 = vmatpush2.msra.mxu0 0.0
        %300 = vmatprep.subr.mxu0 0.0
        %301 = vmatpush2.msra.mxu0 0.0
        %302 = vmatprep.subr.mxu0 0.0
        %303 = vmatpush2.msra.mxu0 0.0
        %304 = vmatprep.subr.mxu0 0.0
        %305 = vmatpush2.msra.mxu0 0.0
        %306 = vmatprep.subr.mxu0 0.0
        %307 = vmatpush2.msra.mxu0 0.0
        %308 = vmatprep.subr.mxu0 0.0
        %309 = vmatpush2.msra.mxu0 0.0
        %310 = vmatprep.subr.mxu0 0.0
        %311 = vmatpush2.msra.mxu0 0.0
        %312 = vmatprep.subr.mxu0 0.0
        %313 = vmatpush2.msra.mxu0 0.0
        %314 = vmatprep.subr.mxu0 0.0
        %315 = vmatpush2.msra.mxu0 0.0
        %316 = vmatprep.subr.mxu0 0.0
        %317 = vmatpush2.msra.mxu0 0.0
        %318 = vmatprep.mubr.f32.mxu0 0.0
        %319 = vmatmul.mubr.f32.gmra.mxu0 %v252
        %v320 = vpop.f32.mrf.mxu0
        %v321 = vadd.f32 %v238, %v320
        %v322 = vpop.f32.mrf.mxu0
        %v323 = vadd.f32 %v242, %v322
        %324 = vdwg.mxu0
        %325 = vmatprep.subr.mxu0 0.0
        %326 = vmatpush1.msra.mxu0 0.0
        %327 = vmatprep.subr.mxu0 0.0
        %328 = vmatpush1.msra.mxu0 0.0
        %329 = vmatprep.subr.mxu0 0.0
        %330 = vmatpush1.msra.mxu0 0.0
        %331 = vmatprep.subr.mxu0 0.0
        %332 = vmatpush1.msra.mxu0 0.0
        %333 = vmatprep.subr.mxu0 0.0
        %334 = vmatpush1.msra.mxu0 0.0
        %335 = vmatprep.subr.mxu0 0.0
        %336 = vmatpush1.msra.mxu0 0.0
        %337 = vmatprep.subr.mxu0 0.0
        %338 = vmatpush1.msra.mxu0 0.0
        %339 = vmatprep.subr.mxu0 0.0
        %340 = vmatpush1.msra.mxu0 0.0
        %341 = vmatprep.subr.mxu0 0.0
        %342 = vmatpush1.msra.mxu0 0.0
        %343 = vmatprep.subr.mxu0 0.0
        %344 = vmatpush1.msra.mxu0 0.0
        %345 = vmatprep.subr.mxu0 0.0
        %346 = vmatpush1.msra.mxu0 0.0
        %347 = vmatprep.subr.mxu0 0.0
        %348 = vmatpush1.msra.mxu0 0.0
        %349 = vmatprep.subr.mxu0 0.0
        %350 = vmatpush1.msra.mxu0 %v232
        %351 = vmatprep.subr.mxu0 0.0
        %352 = vmatpush1.msra.mxu0 %v229
        %353 = vmatprep.subr.mxu0 0.0
        %354 = vmatpush1.msra.mxu0 %v226
        %355 = vmatprep.subr.mxu0 0.0
        %356 = vmatpush1.msra.mxu0 %v223
        %357 = vmatprep.subr.mxu0 0.0
        %358 = vmatpush2.msra.mxu0 0.0
        %359 = vmatprep.subr.mxu0 0.0
        %360 = vmatpush2.msra.mxu0 0.0
        %361 = vmatprep.subr.mxu0 0.0
        %362 = vmatpush2.msra.mxu0 0.0
        %363 = vmatprep.subr.mxu0 0.0
        %364 = vmatpush2.msra.mxu0 0.0
        %365 = vmatprep.subr.mxu0 0.0
        %366 = vmatpush2.msra.mxu0 0.0
        %367 = vmatprep.subr.mxu0 0.0
        %368 = vmatpush2.msra.mxu0 0.0
        %369 = vmatprep.subr.mxu0 0.0
        %370 = vmatpush2.msra.mxu0 0.0
        %371 = vmatprep.subr.mxu0 0.0
        %372 = vmatpush2.msra.mxu0 0.0
        %373 = vmatprep.subr.mxu0 0.0
        %374 = vmatpush2.msra.mxu0 0.0
        %375 = vmatprep.subr.mxu0 0.0
        %376 = vmatpush2.msra.mxu0 0.0
        %377 = vmatprep.subr.mxu0 0.0
        %378 = vmatpush2.msra.mxu0 0.0
        %379 = vmatprep.subr.mxu0 0.0
        %380 = vmatpush2.msra.mxu0 0.0
        %381 = vmatprep.subr.mxu0 0.0
        %382 = vmatpush2.msra.mxu0 0.0
        %383 = vmatprep.subr.mxu0 0.0
        %384 = vmatpush2.msra.mxu0 0.0
        %385 = vmatprep.subr.mxu0 0.0
        %386 = vmatpush2.msra.mxu0 0.0
        %387 = vmatprep.subr.mxu0 0.0
        %388 = vmatpush2.msra.mxu0 0.0
        %389 = vmatprep.mubr.f32.mxu0 0.0
        %390 = vmatmul.mubr.f32.gmra.mxu0 %v252
        %v391 = vpop.f32.mrf.mxu0
        %v392 = vadd.f32 %v246, %v391
        %v393 = vpop.f32.mrf.mxu0
        %394 = vdwg.mxu0
        %vm395 = vcmask 523264
        %v397 = vsel %vm395, %v321, 0
        %v400 = vsel %vm395, %v323, 0
        %402 = vmatprep.subr.mxu0 0.0
        %403 = vmatpush1.xpose.msra.mxu0 0.0
        %404 = vmatprep.subr.mxu0 0.0
        %405 = vmatpush1.xpose.msra.mxu0 0.0
        %406 = vmatprep.subr.mxu0 0.0
        %407 = vmatpush1.xpose.msra.mxu0 0.0
        %408 = vmatprep.subr.mxu0 0.0
        %409 = vmatpush1.xpose.msra.mxu0 0.0
        %410 = vmatprep.subr.mxu0 0.0
        %411 = vmatpush1.xpose.msra.mxu0 0.0
        %412 = vmatprep.subr.mxu0 0.0
        %413 = vmatpush1.xpose.msra.mxu0 0.0
        %414 = vmatprep.subr.mxu0 0.0
        %415 = vmatpush1.xpose.msra.mxu0 0.0
        %416 = vmatprep.subr.mxu0 0.0
        %417 = vmatpush1.xpose.msra.mxu0 0.0
        %418 = vmatprep.subr.mxu0 0.0
        %419 = vmatpush1.xpose.msra.mxu0 0.0
        %420 = vmatprep.subr.mxu0 0.0
        %421 = vmatpush1.xpose.msra.mxu0 0.0
        %422 = vmatprep.subr.mxu0 0.0
        %423 = vmatpush1.xpose.msra.mxu0 0.0
        %424 = vmatprep.subr.mxu0 0.0
        %425 = vmatpush1.xpose.msra.mxu0 0.0
        %426 = vmatprep.subr.mxu0 0.0
        %427 = vmatpush1.xpose.msra.mxu0 0.0
        %428 = vmatprep.subr.mxu0 0.0
        %429 = vmatpush1.xpose.msra.mxu0 0.0
        %430 = vmatprep.subr.mxu0 0.0
        %431 = vmatpush1.xpose.msra.mxu0 0.0
        %432 = vmatprep.subr.mxu0 0.0
        %433 = vmatpush1.xpose.msra.mxu0 %v400
        %434 = vmatprep.subr.mxu0 0.0
        %435 = vmatpush2.xpose.msra.mxu0 0.0
        %436 = vmatprep.subr.mxu0 0.0
        %437 = vmatpush2.xpose.msra.mxu0 0.0
        %438 = vmatprep.subr.mxu0 0.0
        %439 = vmatpush2.xpose.msra.mxu0 0.0
        %440 = vmatprep.subr.mxu0 0.0
        %441 = vmatpush2.xpose.msra.mxu0 0.0
        %442 = vmatprep.subr.mxu0 0.0
        %443 = vmatpush2.xpose.msra.mxu0 0.0
        %444 = vmatprep.subr.mxu0 0.0
        %445 = vmatpush2.xpose.msra.mxu0 0.0
        %446 = vmatprep.subr.mxu0 0.0
        %447 = vmatpush2.xpose.msra.mxu0 0.0
        %448 = vmatprep.subr.mxu0 0.0
        %449 = vmatpush2.xpose.msra.mxu0 0.0
        %450 = vmatprep.subr.mxu0 0.0
        %451 = vmatpush2.xpose.msra.mxu0 0.0
        %452 = vmatprep.subr.mxu0 0.0
        %453 = vmatpush2.xpose.msra.mxu0 0.0
        %454 = vmatprep.subr.mxu0 0.0
        %455 = vmatpush2.xpose.msra.mxu0 0.0
        %456 = vmatprep.subr.mxu0 0.0
        %457 = vmatpush2.xpose.msra.mxu0 0.0
        %458 = vmatprep.subr.mxu0 0.0
        %459 = vmatpush2.xpose.msra.mxu0 0.0
        %460 = vmatprep.subr.mxu0 0.0
        %461 = vmatpush2.xpose.msra.mxu0 0.0
        %462 = vmatprep.subr.mxu0 0.0
        %463 = vmatpush2.xpose.msra.mxu0 0.0
        %464 = vmatprep.subr.mxu0 0.0
        %465 = vmatpush2.xpose.msra.mxu0 0.0
        %466 = vmatprep.mubr.f32.mxu0 0.0
        %467 = vmatmul.mubr.f32.gmra.mxu0 %v397
        %v468 = vpop.f32.mrf.mxu0
        %v469 = vadd.f32 0.0, %v468
        %v470 = vpop.f32.mrf.mxu0
        %471 = vdwg.mxu0
        %v472 = vmul.f32 %v469, 0.125
        %vm473 = vcmask 64512
        %v474 = vsel %vm473, %v472, -inf
        %475 = vmax.xlane.f32.xlu0 %v474
        %v476 = vpop.xlane.xlu0 %475
        %v477 = vsub.f32 %v472, %v476
        %v478 = vmul.f32 %v477, 1.442695
        %v479 = vpow.pop %v478
        %v480 = vsel %vm473, %v479, 0.0
        %481 = vadd.xlane.f32.xlu0 %v480
        %v482 = vpop.xlane.xlu0 %481
        %v483 = vrcp.pop %v482
        %v484 = vmul.f32 %v479, %v483
        %v486 = vsel %vm473, %v484, 0
        %488 = vmatprep.subr.mxu0 0.0
        %489 = vmatpush1.msra.mxu0 0.0
        %490 = vmatprep.subr.mxu0 0.0
        %491 = vmatpush1.msra.mxu0 0.0
        %492 = vmatprep.subr.mxu0 0.0
        %493 = vmatpush1.msra.mxu0 0.0
        %494 = vmatprep.subr.mxu0 0.0
        %495 = vmatpush1.msra.mxu0 0.0
        %496 = vmatprep.subr.mxu0 0.0
        %497 = vmatpush1.msra.mxu0 0.0
        %498 = vmatprep.subr.mxu0 0.0
        %499 = vmatpush1.msra.mxu0 0.0
        %500 = vmatprep.subr.mxu0 0.0
        %501 = vmatpush1.msra.mxu0 0.0
        %502 = vmatprep.subr.mxu0 0.0
        %503 = vmatpush1.msra.mxu0 0.0
        %504 = vmatprep.subr.mxu0 0.0
        %505 = vmatpush1.msra.mxu0 0.0
        %506 = vmatprep.subr.mxu0 0.0
        %507 = vmatpush1.msra.mxu0 0.0
        %508 = vmatprep.subr.mxu0 0.0
        %509 = vmatpush1.msra.mxu0 0.0
        %510 = vmatprep.subr.mxu0 0.0
        %511 = vmatpush1.msra.mxu0 0.0
        %512 = vmatprep.subr.mxu0 0.0
        %513 = vmatpush1.msra.mxu0 0.0
        %514 = vmatprep.subr.mxu0 0.0
        %515 = vmatpush1.msra.mxu0 0.0
        %516 = vmatprep.subr.mxu0 0.0
        %517 = vmatpush1.msra.mxu0 0.0
        %518 = vmatprep.subr.mxu0 0.0
        %519 = vmatpush1.msra.mxu0 %v392
        %520 = vmatprep.subr.mxu0 0.0
        %521 = vmatpush2.msra.mxu0 0.0
        %522 = vmatprep.subr.mxu0 0.0
        %523 = vmatpush2.msra.mxu0 0.0
        %524 = vmatprep.subr.mxu0 0.0
        %525 = vmatpush2.msra.mxu0 0.0
        %526 = vmatprep.subr.mxu0 0.0
        %527 = vmatpush2.msra.mxu0 0.0
        %528 = vmatprep.subr.mxu0 0.0
        %529 = vmatpush2.msra.mxu0 0.0
        %530 = vmatprep.subr.mxu0 0.0
        %531 = vmatpush2.msra.mxu0 0.0
        %532 = vmatprep.subr.mxu0 0.0
        %533 = vmatpush2.msra.mxu0 0.0
        %534 = vmatprep.subr.mxu0 0.0
        %535 = vmatpush2.msra.mxu0 0.0
        %536 = vmatprep.subr.mxu0 0.0
        %537 = vmatpush2.msra.mxu0 0.0
        %538 = vmatprep.subr.mxu0 0.0
        %539 = vmatpush2.msra.mxu0 0.0
        %540 = vmatprep.subr.mxu0 0.0
        %541 = vmatpush2.msra.mxu0 0.0
        %542 = vmatprep.subr.mxu0 0.0
        %543 = vmatpush2.msra.mxu0 0.0
        %544 = vmatprep.subr.mxu0 0.0
        %545 = vmatpush2.msra.mxu0 0.0
        %546 = vmatprep.subr.mxu0 0.0
        %547 = vmatpush2.msra.mxu0 0.0
        %548 = vmatprep.subr.mxu0 0.0
        %549 = vmatpush2.msra.mxu0 0.0
        %550 = vmatprep.subr.mxu0 0.0
        %551 = vmatpush2.msra.mxu0 0.0
        %552 = vmatprep.mubr.f32.mxu0 0.0
        %553 = vmatmul.mubr.f32.gmra.mxu0 %v486
        %v554 = vpop.f32.mrf.mxu0
        %v555 = vadd.f32 0.0, %v554
        %v556 = vpop.f32.mrf.mxu0
        %557 = vdwg.mxu0
        %v558 = vld [vmem:[%s3] sm:$0xff]
        %v559 = vld [vmem:[%s3 + $0x8] sm:$0xff]
        %v560 = vld [vmem:[%s3 + $0x10] sm:$0xff]
        %v561 = vld [vmem:[%s3 + $0x18] sm:$0xff]
        %v562 = vld [vmem:[%s3 + $0x20] sm:$0xff]
        %v563 = vld [vmem:[%s3 + $0x28] sm:$0xff]
        %v564 = vld [vmem:[%s3 + $0x30] sm:$0xff]
        %v565 = vld [vmem:[%s3 + $0x38] sm:$0xff]
        %566 = vrot.lane.b32.xlu0 %v321, 64
        %v567 = vpop.permute.xlu0 %566
        %568 = vrot.lane.b32.xlu0 %v323, 64
        %v569 = vpop.permute.xlu0 %568
        %v570 = vsel %vm395, %v567, 0
        %v572 = vsel %vm395, %v569, 0
        %574 = vmatprep.subr.mxu0 0.0
        %575 = vmatpush1.xpose.msra.mxu0 0.0
        %576 = vmatprep.subr.mxu0 0.0
        %577 = vmatpush1.xpose.msra.mxu0 0.0
        %578 = vmatprep.subr.mxu0 0.0
        %579 = vmatpush1.xpose.msra.mxu0 0.0
        %580 = vmatprep.subr.mxu0 0.0
        %581 = vmatpush1.xpose.msra.mxu0 0.0
        %582 = vmatprep.subr.mxu0 0.0
        %583 = vmatpush1.xpose.msra.mxu0 0.0
        %584 = vmatprep.subr.mxu0 0.0
        %585 = vmatpush1.xpose.msra.mxu0 0.0
        %586 = vmatprep.subr.mxu0 0.0
        %587 = vmatpush1.xpose.msra.mxu0 0.0
        %588 = vmatprep.subr.mxu0 0.0
        %589 = vmatpush1.xpose.msra.mxu0 0.0
        %590 = vmatprep.subr.mxu0 0.0
        %591 = vmatpush1.xpose.msra.mxu0 0.0
        %592 = vmatprep.subr.mxu0 0.0
        %593 = vmatpush1.xpose.msra.mxu0 0.0
        %594 = vmatprep.subr.mxu0 0.0
        %595 = vmatpush1.xpose.msra.mxu0 0.0
        %596 = vmatprep.subr.mxu0 0.0
        %597 = vmatpush1.xpose.msra.mxu0 0.0
        %598 = vmatprep.subr.mxu0 0.0
        %599 = vmatpush1.xpose.msra.mxu0 0.0
        %600 = vmatprep.subr.mxu0 0.0
        %601 = vmatpush1.xpose.msra.mxu0 0.0
        %602 = vmatprep.subr.mxu0 0.0
        %603 = vmatpush1.xpose.msra.mxu0 0.0
        %604 = vmatprep.subr.mxu0 0.0
        %605 = vmatpush1.xpose.msra.mxu0 %v572
        %606 = vmatprep.subr.mxu0 0.0
        %607 = vmatpush2.xpose.msra.mxu0 0.0
        %608 = vmatprep.subr.mxu0 0.0
        %609 = vmatpush2.xpose.msra.mxu0 0.0
        %610 = vmatprep.subr.mxu0 0.0
        %611 = vmatpush2.xpose.msra.mxu0 0.0
        %612 = vmatprep.subr.mxu0 0.0
        %613 = vmatpush2.xpose.msra.mxu0 0.0
        %614 = vmatprep.subr.mxu0 0.0
        %615 = vmatpush2.xpose.msra.mxu0 0.0
        %616 = vmatprep.subr.mxu0 0.0
        %617 = vmatpush2.xpose.msra.mxu0 0.0
        %618 = vmatprep.subr.mxu0 0.0
        %619 = vmatpush2.xpose.msra.mxu0 0.0
        %620 = vmatprep.subr.mxu0 0.0
        %621 = vmatpush2.xpose.msra.mxu0 0.0
        %622 = vmatprep.subr.mxu0 0.0
        %623 = vmatpush2.xpose.msra.mxu0 0.0
        %624 = vmatprep.subr.mxu0 0.0
        %625 = vmatpush2.xpose.msra.mxu0 0.0
        %626 = vmatprep.subr.mxu0 0.0
        %627 = vmatpush2.xpose.msra.mxu0 0.0
        %628 = vmatprep.subr.mxu0 0.0
        %629 = vmatpush2.xpose.msra.mxu0 0.0
        %630 = vmatprep.subr.mxu0 0.0
        %631 = vmatpush2.xpose.msra.mxu0 0.0
        %632 = vmatprep.subr.mxu0 0.0
        %633 = vmatpush2.xpose.msra.mxu0 0.0
        %634 = vmatprep.subr.mxu0 0.0
        %635 = vmatpush2.xpose.msra.mxu0 0.0
        %636 = vmatprep.subr.mxu0 0.0
        %637 = vmatpush2.xpose.msra.mxu0 0.0
        %638 = vmatprep.mubr.f32.mxu0 0.0
        %639 = vmatmul.mubr.f32.gmra.mxu0 %v570
        %v640 = vpop.f32.mrf.mxu0
        %v641 = vadd.f32 0.0, %v640
        %v642 = vpop.f32.mrf.mxu0
        %643 = vdwg.mxu0
        %v644 = vmul.f32 %v641, 0.125
        %v645 = vsel %vm473, %v644, -inf
        %646 = vmax.xlane.f32.xlu0 %v645
        %v647 = vpop.xlane.xlu0 %646
        %v648 = vsub.f32 %v644, %v647
        %v649 = vmul.f32 %v648, 1.442695
        %v650 = vpow.pop %v649
        %v651 = vsel %vm473, %v650, 0.0
        %652 = vadd.xlane.f32.xlu0 %v651
        %v653 = vpop.xlane.xlu0 %652
        %v654 = vrcp.pop %v653
        %v655 = vmul.f32 %v650, %v654
        %657 = vrot.lane.b32.xlu0 %v392, 64
        %v658 = vpop.permute.xlu0 %657
        %v661 = vsel %vm473, %v655, 0
        %663 = vmatprep.subr.mxu0 0.0
        %664 = vmatpush1.msra.mxu0 0.0
        %665 = vmatprep.subr.mxu0 0.0
        %666 = vmatpush1.msra.mxu0 0.0
        %667 = vmatprep.subr.mxu0 0.0
        %668 = vmatpush1.msra.mxu0 0.0
        %669 = vmatprep.subr.mxu0 0.0
        %670 = vmatpush1.msra.mxu0 0.0
        %671 = vmatprep.subr.mxu0 0.0
        %672 = vmatpush1.msra.mxu0 0.0
        %673 = vmatprep.subr.mxu0 0.0
        %674 = vmatpush1.msra.mxu0 0.0
        %675 = vmatprep.subr.mxu0 0.0
        %676 = vmatpush1.msra.mxu0 0.0
        %677 = vmatprep.subr.mxu0 0.0
        %678 = vmatpush1.msra.mxu0 0.0
        %679 = vmatprep.subr.mxu0 0.0
        %680 = vmatpush1.msra.mxu0 0.0
        %681 = vmatprep.subr.mxu0 0.0
        %682 = vmatpush1.msra.mxu0 0.0
        %683 = vmatprep.subr.mxu0 0.0
        %684 = vmatpush1.msra.mxu0 0.0
        %685 = vmatprep.subr.mxu0 0.0
        %686 = vmatpush1.msra.mxu0 0.0
        %687 = vmatprep.subr.mxu0 0.0
        %688 = vmatpush1.msra.mxu0 0.0
        %689 = vmatprep.subr.mxu0 0.0
        %690 = vmatpush1.msra.mxu0 0.0
        %691 = vmatprep.subr.mxu0 0.0
        %692 = vmatpush1.msra.mxu0 0.0
        %693 = vmatprep.subr.mxu0 0.0
        %694 = vmatpush1.msra.mxu0 %v658
        %695 = vmatprep.subr.mxu0 0.0
        %696 = vmatpush2.msra.mxu0 0.0
        %697 = vmatprep.subr.mxu0 0.0
        %698 = vmatpush2.msra.mxu0 0.0
        %699 = vmatprep.subr.mxu0 0.0
        %700 = vmatpush2.msra.mxu0 0.0
        %701 = vmatprep.subr.mxu0 0.0
        %702 = vmatpush2.msra.mxu0 0.0
        %703 = vmatprep.subr.mxu0 0.0
        %704 = vmatpush2.msra.mxu0 0.0
        %705 = vmatprep.subr.mxu0 0.0
        %706 = vmatpush2.msra.mxu0 0.0
        %707 = vmatprep.subr.mxu0 0.0
        %708 = vmatpush2.msra.mxu0 0.0
        %709 = vmatprep.subr.mxu0 0.0
        %710 = vmatpush2.msra.mxu0 0.0
        %711 = vmatprep.subr.mxu0 0.0
        %712 = vmatpush2.msra.mxu0 0.0
        %713 = vmatprep.subr.mxu0 0.0
        %714 = vmatpush2.msra.mxu0 0.0
        %715 = vmatprep.subr.mxu0 0.0
        %716 = vmatpush2.msra.mxu0 0.0
        %717 = vmatprep.subr.mxu0 0.0
        %718 = vmatpush2.msra.mxu0 0.0
        %719 = vmatprep.subr.mxu0 0.0
        %720 = vmatpush2.msra.mxu0 0.0
        %721 = vmatprep.subr.mxu0 0.0
        %722 = vmatpush2.msra.mxu0 0.0
        %723 = vmatprep.subr.mxu0 0.0
        %724 = vmatpush2.msra.mxu0 0.0
        %725 = vmatprep.subr.mxu0 0.0
        %726 = vmatpush2.msra.mxu0 0.0
        %727 = vmatprep.mubr.f32.mxu0 0.0
        %728 = vmatmul.mubr.f32.gmra.mxu0 %v661
        %v729 = vpop.f32.mrf.mxu0
        %v730 = vadd.f32 0.0, %v729
        %v731 = vpop.f32.mrf.mxu0
        %732 = vdwg.mxu0
        %v733 = vld [vmem:[%s3 + $0x40] sm:$0xff]
        %v734 = vld [vmem:[%s3 + $0x48] sm:$0xff]
        %v735 = vld [vmem:[%s3 + $0x50] sm:$0xff]
        %v736 = vld [vmem:[%s3 + $0x58] sm:$0xff]
        %v737 = vld [vmem:[%s3 + $0x60] sm:$0xff]
        %v738 = vld [vmem:[%s3 + $0x68] sm:$0xff]
        %v739 = vld [vmem:[%s3 + $0x70] sm:$0xff]
        %v740 = vld [vmem:[%s3 + $0x78] sm:$0xff]
        %v742 = vsel %vm395, %v730, 0
        %744 = vmatprep.subr.mxu0 0.0
        %745 = vmatpush1.msra.mxu0 0.0
        %746 = vmatprep.subr.mxu0 0.0
        %747 = vmatpush1.msra.mxu0 0.0
        %748 = vmatprep.subr.mxu0 0.0
        %749 = vmatpush1.msra.mxu0 0.0
        %750 = vmatprep.subr.mxu0 0.0
        %751 = vmatpush1.msra.mxu0 0.0
        %752 = vmatprep.subr.mxu0 0.0
        %753 = vmatpush1.msra.mxu0 0.0
        %754 = vmatprep.subr.mxu0 0.0
        %755 = vmatpush1.msra.mxu0 0.0
        %756 = vmatprep.subr.mxu0 0.0
        %757 = vmatpush1.msra.mxu0 0.0
        %758 = vmatprep.subr.mxu0 0.0
        %759 = vmatpush1.msra.mxu0 0.0
        %760 = vmatprep.subr.mxu0 0.0
        %761 = vmatpush1.msra.mxu0 %v740
        %762 = vmatprep.subr.mxu0 0.0
        %763 = vmatpush1.msra.mxu0 %v739
        %764 = vmatprep.subr.mxu0 0.0
        %765 = vmatpush1.msra.mxu0 %v738
        %766 = vmatprep.subr.mxu0 0.0
        %767 = vmatpush1.msra.mxu0 %v737
        %768 = vmatprep.subr.mxu0 0.0
        %769 = vmatpush1.msra.mxu0 %v736
        %770 = vmatprep.subr.mxu0 0.0
        %771 = vmatpush1.msra.mxu0 %v735
        %772 = vmatprep.subr.mxu0 0.0
        %773 = vmatpush1.msra.mxu0 %v734
        %774 = vmatprep.subr.mxu0 0.0
        %775 = vmatpush1.msra.mxu0 %v733
        %776 = vmatprep.subr.mxu0 0.0
        %777 = vmatpush2.msra.mxu0 0.0
        %778 = vmatprep.subr.mxu0 0.0
        %779 = vmatpush2.msra.mxu0 0.0
        %780 = vmatprep.subr.mxu0 0.0
        %781 = vmatpush2.msra.mxu0 0.0
        %782 = vmatprep.subr.mxu0 0.0
        %783 = vmatpush2.msra.mxu0 0.0
        %784 = vmatprep.subr.mxu0 0.0
        %785 = vmatpush2.msra.mxu0 0.0
        %786 = vmatprep.subr.mxu0 0.0
        %787 = vmatpush2.msra.mxu0 0.0
        %788 = vmatprep.subr.mxu0 0.0
        %789 = vmatpush2.msra.mxu0 0.0
        %790 = vmatprep.subr.mxu0 0.0
        %791 = vmatpush2.msra.mxu0 0.0
        %792 = vmatprep.subr.mxu0 0.0
        %793 = vmatpush2.msra.mxu0 0.0
        %794 = vmatprep.subr.mxu0 0.0
        %795 = vmatpush2.msra.mxu0 0.0
        %796 = vmatprep.subr.mxu0 0.0
        %797 = vmatpush2.msra.mxu0 0.0
        %798 = vmatprep.subr.mxu0 0.0
        %799 = vmatpush2.msra.mxu0 0.0
        %800 = vmatprep.subr.mxu0 0.0
        %801 = vmatpush2.msra.mxu0 0.0
        %802 = vmatprep.subr.mxu0 0.0
        %803 = vmatpush2.msra.mxu0 0.0
        %804 = vmatprep.subr.mxu0 0.0
        %805 = vmatpush2.msra.mxu0 0.0
        %806 = vmatprep.subr.mxu0 0.0
        %807 = vmatpush2.msra.mxu0 0.0
        %808 = vmatprep.mubr.f32.mxu0 0.0
        %809 = vmatmul.mubr.f32.gmra.mxu0 %v742
        %v810 = vpop.f32.mrf.mxu0
        %v811 = vadd.f32 0.0, %v810
        %v812 = vpop.f32.mrf.mxu0
        %813 = vdwg.mxu0
        %v815 = vsel %vm395, %v555, 0
        %817 = vmatprep.subr.mxu0 0.0
        %818 = vmatpush1.msra.mxu0 0.0
        %819 = vmatprep.subr.mxu0 0.0
        %820 = vmatpush1.msra.mxu0 0.0
        %821 = vmatprep.subr.mxu0 0.0
        %822 = vmatpush1.msra.mxu0 0.0
        %823 = vmatprep.subr.mxu0 0.0
        %824 = vmatpush1.msra.mxu0 0.0
        %825 = vmatprep.subr.mxu0 0.0
        %826 = vmatpush1.msra.mxu0 0.0
        %827 = vmatprep.subr.mxu0 0.0
        %828 = vmatpush1.msra.mxu0 0.0
        %829 = vmatprep.subr.mxu0 0.0
        %830 = vmatpush1.msra.mxu0 0.0
        %831 = vmatprep.subr.mxu0 0.0
        %832 = vmatpush1.msra.mxu0 0.0
        %833 = vmatprep.subr.mxu0 0.0
        %834 = vmatpush1.msra.mxu0 %v565
        %835 = vmatprep.subr.mxu0 0.0
        %836 = vmatpush1.msra.mxu0 %v564
        %837 = vmatprep.subr.mxu0 0.0
        %838 = vmatpush1.msra.mxu0 %v563
        %839 = vmatprep.subr.mxu0 0.0
        %840 = vmatpush1.msra.mxu0 %v562
        %841 = vmatprep.subr.mxu0 0.0
        %842 = vmatpush1.msra.mxu0 %v561
        %843 = vmatprep.subr.mxu0 0.0
        %844 = vmatpush1.msra.mxu0 %v560
        %845 = vmatprep.subr.mxu0 0.0
        %846 = vmatpush1.msra.mxu0 %v559
        %847 = vmatprep.subr.mxu0 0.0
        %848 = vmatpush1.msra.mxu0 %v558
        %849 = vmatprep.subr.mxu0 0.0
        %850 = vmatpush2.msra.mxu0 0.0
        %851 = vmatprep.subr.mxu0 0.0
        %852 = vmatpush2.msra.mxu0 0.0
        %853 = vmatprep.subr.mxu0 0.0
        %854 = vmatpush2.msra.mxu0 0.0
        %855 = vmatprep.subr.mxu0 0.0
        %856 = vmatpush2.msra.mxu0 0.0
        %857 = vmatprep.subr.mxu0 0.0
        %858 = vmatpush2.msra.mxu0 0.0
        %859 = vmatprep.subr.mxu0 0.0
        %860 = vmatpush2.msra.mxu0 0.0
        %861 = vmatprep.subr.mxu0 0.0
        %862 = vmatpush2.msra.mxu0 0.0
        %863 = vmatprep.subr.mxu0 0.0
        %864 = vmatpush2.msra.mxu0 0.0
        %865 = vmatprep.subr.mxu0 0.0
        %866 = vmatpush2.msra.mxu0 0.0
        %867 = vmatprep.subr.mxu0 0.0
        %868 = vmatpush2.msra.mxu0 0.0
        %869 = vmatprep.subr.mxu0 0.0
        %870 = vmatpush2.msra.mxu0 0.0
        %871 = vmatprep.subr.mxu0 0.0
        %872 = vmatpush2.msra.mxu0 0.0
        %873 = vmatprep.subr.mxu0 0.0
        %874 = vmatpush2.msra.mxu0 0.0
        %875 = vmatprep.subr.mxu0 0.0
        %876 = vmatpush2.msra.mxu0 0.0
        %877 = vmatprep.subr.mxu0 0.0
        %878 = vmatpush2.msra.mxu0 0.0
        %879 = vmatprep.subr.mxu0 0.0
        %880 = vmatpush2.msra.mxu0 0.0
        %881 = vmatprep.mubr.f32.mxu0 0.0
        %882 = vmatmul.mubr.f32.gmra.mxu0 %v815
        %v883 = vpop.f32.mrf.mxu0
        %v884 = vadd.f32 %v811, %v883
        %v885 = vpop.f32.mrf.mxu0
        %886 = vdwg.mxu0
        %v887 = vld [vmem:[%s4] sm:$0x1]
        %v889 = vlaneseq
        %v890 = vshrl.u32 %v889, 7
        %v891 = vsub.s32 0, %v890
        %v892 = vrot.slane %v887, %v891
        %v894 = vadd.f32 %v884, %v892
        %895 = vst.msk [vmem:[%s215] sm:$0xff] %vm250, %v894
        %s896 = sand.u32 %s137, 1
        %s897 = scalar_lea.sflag [#allocation3], %s896
        %s898 = sand.u32 %s137, 1
        %s899 = smul.addr %s898, 8
        %s900 = scalar_lea.vmem [#allocation2], %s899
        // Predicated region
        $region41: #{attention_pallas.1} parent=39 // pred_check
          %p901 = pneg %p147
        $region42: #{attention_pallas.1} parent=39 // pred_check_branch
          %903 = sbr.rel (%p901) target = $region44
        $region43: #{attention_pallas.1} parent=39 // pred_region
          %s905 = ssub.s32 128, 128
          %906 = vsyncadd %s897, %s905
          %s907 = smul.addr %s19, 128
          %s908 = scalar_lea.hbm %s5, %s907
          %s910 = sshll.u32 %s900, 4
          %s911 = int_to_ptr.vmem [resolvable:$true] %s910
          %913 = dma.vmem_to_hbm [thread:$0]  %s911, 128, %s908, %s897
        $region44: #{attention_pallas.1} parent=39 // pred_fallthru
          _
      $region40: #{attention_pallas.1} parent=5 // pred_fallthru
        _
      %p914 = scmp.le.s32.totalorder 2, %s14
      // Predicated region
      $region45: #{attention_pallas.1} parent=5 // pred_check
        %p915 = pneg %p914
      $region46: #{attention_pallas.1} parent=5 // pred_check_branch
        %917 = sbr.rel (%p915) target = $region48
      $region47: #{attention_pallas.1} parent=5 // pred_region
        %s918 = ssub.s32 %s14, 2
        // Predicated region
        $region49: #{attention_pallas.1} parent=47 // pred_check
          %p919 = pneg %p153
        $region50: #{attention_pallas.1} parent=47 // pred_check_branch
          %921 = sbr.rel (%p919) target = $region52
        $region51: #{attention_pallas.1} parent=47 // pred_region
          %s922 = sand.u32 %s138, 1
          %s923 = scalar_lea.sflag [#allocation3], %s922
          %s924 = sand.u32 %s138, 1
          %s925 = smul.addr %s924, 8
          %s926 = scalar_lea.vmem [#allocation2], %s925
          %927 = dma.done %s923, 128
        $region52: #{attention_pallas.1} parent=47 // pred_fallthru
          _
      $region48: #{attention_pallas.1} parent=5 // pred_fallthru
        _
    $region6: #{attention_pallas.1} parent=1 // loop_footer
      %s18 = sadd.s32 1, %s14
    $region7: #{attention_pallas.1} parent=1 // loop_footer_branch
      %13 = sbr.rel target = $region3
    $region8: #{attention_pallas.1} parent=1 // loop_exit
      _
    %928 = vsyncpa [#allocation3], 1
    %s929 = scalar_lea.sflag [#allocation3], 1
    %930 = vsyncpa %s929, 1

</llo_original>
